<compile_context>
chip_gen: v7x
topology: tpu7x:2x2x1
jax: 0.10.0
libtpu: 0.0.40
codegen_flags: <defaults>
</compile_context>

<pallas_src>
import functools

import jax
import jax.numpy as jnp
from jax.experimental import pallas as pl
from jax.experimental.pallas import tpu as pltpu

LANES = 128
MAX_BLOCK_ROWS = 4096   # (4096,128) f32 = 2 MiB/input tile; 2 in x 2 buf = 8 MiB VMEM
CHUNK_ROWS = 128        # per-iteration slab inside the kernel (16 vregs f32/operand)


def _sublanes(dtype):
    """Second-minor tiling granularity for a dtype (8 f32 / 16 bf16 / 32 int8)."""
    return max(8, 32 // jnp.dtype(dtype).itemsize)


def _elementwise_bce(x, t):
    """Per-element BCE of sigmoid(x) vs t with PyTorch clamp(log, -100) semantics.

    Logits form sharing one stable softplus (one exp + one log per element):
      -log(sigmoid(x))     = softplus(-x)  -> capped at 100
      -log(1 - sigmoid(x)) = softplus(x)   -> capped at 100
    """
    x = x.astype(jnp.float32)
    t = t.astype(jnp.float32)
    abs_x = jnp.abs(x)
    common = jnp.log(1.0 + jnp.exp(-abs_x))
    sp_pos = jnp.maximum(x, 0.0) + common            # softplus(x)
    sp_neg = sp_pos - x                              # softplus(-x)
    return (t * jnp.minimum(sp_neg, 100.0)
            + (1.0 - t) * jnp.minimum(sp_pos, 100.0))


def _bce_partial_kernel(x_ref, t_ref, out_ref, *, rows, block_rows, needs_mask):
    """Writes this block's lane-dense (8,128) partial BCE sum to out_ref."""
    n_full = block_rows // CHUNK_ROWS
    rem = block_rows % CHUNK_ROWS                    # multiple of 8 by construction

    def block_partial(masked):
        if masked:
            # Valid rows remaining in this (last, partial) block.  Rows past it
            # are Pallas partial-block padding (arbitrary data) and must be
            # zeroed before the reduce; jnp.where is a select, so NaN/Inf in the
            # dropped lanes cannot propagate.
            valid = rows - pl.program_id(0) * block_rows

        def piece(row0, nrows):
            loss = _elementwise_bce(x_ref[pl.ds(row0, nrows), :],
                                    t_ref[pl.ds(row0, nrows), :])
            if masked:
                ridx = row0 + jax.lax.broadcasted_iota(jnp.int32, (nrows, LANES), 0)
                loss = jnp.where(ridx < valid, loss, 0.0)
            # Sublane-grouped partial sum: pure vreg adds (VPU), no XLU reduce,
            # no narrow store.
            return jnp.sum(loss.reshape(nrows // 8, 8, LANES), axis=0)

        # Chunked accumulation keeps live values to a few dozen vregs even at
        # 4096-row blocks (a whole-block load would be 512 vregs -> spills),
        # while keeping the big DMA tile.
        acc = jnp.zeros((8, LANES), jnp.float32)
        for c in range(n_full):                      # static, fully unrolled
            acc = acc + piece(c * CHUNK_ROWS, CHUNK_ROWS)
        if rem:
            acc = acc + piece(n_full * CHUNK_ROWS, rem)
        return acc

    if needs_mask:
        last = pl.num_programs(0) - 1

        @pl.when(pl.program_id(0) != last)
        def _():
            out_ref[0] = block_partial(masked=False)

        @pl.when(pl.program_id(0) == last)
        def _():
            out_ref[0] = block_partial(masked=True)
    else:
        out_ref[0] = block_partial(masked=False)


def _bce_mean_pallas(x, targets):
    """Mean BCE of sigmoid(x) vs targets via a parallel partial-sum Pallas kernel."""
    n = x.size
    xf = jnp.ravel(x)          # native dtype: no wrapper astype, no extra HBM pass
    tf = jnp.ravel(targets)

    sub = max(_sublanes(xf.dtype), _sublanes(tf.dtype))
    n128 = (n // LANES) * LANES
    rows = n128 // LANES

    if rows < sub:
        # Tiny input: not worth a kernel launch.
        return jnp.sum(_elementwise_bce(xf, tf)) / jnp.float32(n)

    total = jnp.float32(0.0)
    if n128 != n:
        # <128-element remainder handled by plain jnp (no full-array pad copy).
        # TODO(synk): the prefix slice below materializes one copy when
        # n % 128 != 0; typical NCHW sizes hit the zero-copy path.
        total = total + jnp.sum(_elementwise_bce(xf[n128:], tf[n128:]))
        xf = xf[:n128]
        tf = tf[:n128]

    x2 = xf.reshape(rows, LANES)   # zero-copy reshape of the flat view
    t2 = tf.reshape(rows, LANES)

    # Block-rows selection (all static Python ints):
    #  * cap at 4096 rows -> 8 MiB double-buffered VMEM, safe on v5e's 16 MiB
    #    default scoped budget (v6e/v7x: 32 MiB).
    #  * below the cap, split into >=2 blocks so both v7x TensorCores stream.
    #  * keep block_rows a multiple of the coarsest dtype packing (8/16/32).
    if rows >= 2 * MAX_BLOCK_ROWS:
        block_rows = MAX_BLOCK_ROWS
    else:
        half = -(-rows // 2)
        block_rows = max(sub, (half // sub) * sub)
    num_blocks = -(-rows // block_rows)
    needs_mask = (rows % block_rows) != 0

    kernel = functools.partial(
        _bce_partial_kernel,
        rows=rows, block_rows=block_rows, needs_mask=needs_mask)

    partials = pl.pallas_call(
        kernel,
        out_shape=jax.ShapeDtypeStruct((num_blocks, 8, LANES), jnp.float32),
        grid_spec=pltpu.PrefetchScalarGridSpec(
            num_scalar_prefetch=0,
            grid=(num_blocks,),
            in_specs=[
                pl.BlockSpec((block_rows, LANES), lambda i: (i, 0)),
                pl.BlockSpec((block_rows, LANES), lambda i: (i, 0)),
            ],
            out_specs=pl.BlockSpec((1, 8, LANES), lambda i: (i, 0, 0)),
        ),
        # Each program writes its own partial -> no carried state, truly
        # parallel grid axis.
        # TODO(synk): on v7x, confirm this axis shards over both TensorCores;
        # if not, switch to pltpu.CORE_PARALLEL for this dimension.
        compiler_params=pltpu.CompilerParams(
            dimension_semantics=("parallel",)),
    )(x2, t2)

    total = total + jnp.sum(partials)
    return total / jnp.float32(n)


def focal_loss(x, targets, alpha=0.8, gamma=2):
    """Reproduces FocalLoss.forward: returns a length-2 vector (alpha broadcast)."""
    bce = _bce_mean_pallas(x, targets)               # scalar, mean reduction
    alpha_vec = jnp.array([alpha, 1.0 - alpha], dtype=jnp.float32)
    bce_exp = jnp.exp(-bce)
    return alpha_vec * (1.0 - bce_exp) ** gamma * bce


def _reference(x, targets, alpha=0.8, gamma=2):
    """Pure-JAX mirror of the PyTorch forward (sigmoid -> clamped-log BCE)."""
    p = jax.nn.sigmoid(x.astype(jnp.float32)).ravel()
    t = targets.astype(jnp.float32).ravel()
    bce = jnp.mean(-(t * jnp.maximum(jnp.log(p), -100.0)
                     + (1.0 - t) * jnp.maximum(jnp.log(1.0 - p), -100.0)))
    alpha_vec = jnp.array([alpha, 1.0 - alpha], dtype=jnp.float32)
    return alpha_vec * (1.0 - jnp.exp(-bce)) ** gamma * bce


if __name__ == "__main__":
    key = jax.random.PRNGKey(0)
    kx, kt = jax.random.split(key)
    # NCHW logits and binary targets (typical segmentation use).
    x = jax.random.normal(kx, (2, 4, 16, 16), dtype=jnp.float32)
    targets = (jax.random.uniform(kt, (2, 4, 16, 16)) > 0.5).astype(jnp.float32)

    out = focal_loss(x, targets)
    jax.block_until_ready(out)

    ref = _reference(x, targets)
    assert out.shape == (2,)
    assert jnp.allclose(out, ref, rtol=1e-5, atol=1e-6), (out, ref)
    print("KERNEL_OK")
</pallas_src>

<mosaic_0001>
module attributes {stable_mosaic.version = 11 : i64} {
  func.func @_bce_partial_kernel(%arg0: i32, %arg1: memref<8x128xf32, #tpu.memory_space<vmem>>, %arg2: memref<8x128xf32, #tpu.memory_space<vmem>>, %arg3: memref<1x8x128xf32, #tpu.memory_space<vmem>>) attributes {dimension_semantics = [#tpu.dimension_semantics<parallel>], iteration_bounds = array<i64: 2>, scalar_prefetch = 0 : i64, scratch_operands = 0 : i64, tpu.core_type = #tpu.core_type<tc>, window_params = [{transform_indices = @transform_0, window_bounds = array<i64: 8, 128>}, {transform_indices = @transform_1, window_bounds = array<i64: 8, 128>}, {transform_indices = @transform_2, window_bounds = array<i64: 1, 8, 128>}]} {
    %cst = arith.constant 0.000000e+00 : f32
    %0 = vector.broadcast %cst : f32 to vector<8x128xf32>
    %c0 = arith.constant 0 : index
    %c0_0 = arith.constant 0 : index
    %1 = vector.load %arg1[%c0, %c0_0] : memref<8x128xf32, #tpu.memory_space<vmem>>, vector<8x128xf32>
    %c0_1 = arith.constant 0 : index
    %c0_2 = arith.constant 0 : index
    %2 = vector.load %arg2[%c0_1, %c0_2] : memref<8x128xf32, #tpu.memory_space<vmem>>, vector<8x128xf32>
    %3 = math.absf %1 : vector<8x128xf32>
    %cst_3 = arith.constant 0.000000e+00 : f32
    %4 = vector.broadcast %cst_3 : f32 to vector<8x128xf32>
    %5 = arith.subf %4, %3 : vector<8x128xf32>
    %6 = math.exp %5 : vector<8x128xf32>
    %cst_4 = arith.constant 1.000000e+00 : f32
    %7 = vector.broadcast %cst_4 : f32 to vector<8x128xf32>
    %8 = arith.addf %7, %6 : vector<8x128xf32>
    %9 = math.log %8 : vector<8x128xf32>
    %cst_5 = arith.constant 0.000000e+00 : f32
    %10 = vector.broadcast %cst_5 : f32 to vector<8x128xf32>
    %11 = arith.maximumf %1, %10 : vector<8x128xf32>
    %12 = arith.addf %11, %9 : vector<8x128xf32>
    %13 = arith.subf %12, %1 : vector<8x128xf32>
    %cst_6 = arith.constant 1.000000e+02 : f32
    %14 = vector.broadcast %cst_6 : f32 to vector<8x128xf32>
    %15 = arith.minimumf %13, %14 : vector<8x128xf32>
    %16 = arith.mulf %2, %15 : vector<8x128xf32>
    %cst_7 = arith.constant 1.000000e+00 : f32
    %17 = vector.broadcast %cst_7 : f32 to vector<8x128xf32>
    %18 = arith.subf %17, %2 : vector<8x128xf32>
    %cst_8 = arith.constant 1.000000e+02 : f32
    %19 = vector.broadcast %cst_8 : f32 to vector<8x128xf32>
    %20 = arith.minimumf %12, %19 : vector<8x128xf32>
    %21 = arith.mulf %18, %20 : vector<8x128xf32>
    %22 = arith.addf %16, %21 : vector<8x128xf32>
    %23 = vector.shape_cast %22 : vector<8x128xf32> to vector<1x8x128xf32>
    %cst_9 = arith.constant dense<0.000000e+00> : vector<8x128xf32>
    %24 = vector.multi_reduction <add>, %23, %cst_9 [0] : vector<1x8x128xf32> to vector<8x128xf32>
    %25 = arith.addf %0, %24 : vector<8x128xf32>
    %c0_10 = arith.constant 0 : index
    %c0_11 = arith.constant 0 : index
    %c0_12 = arith.constant 0 : index
    %26 = vector.load %arg3[%c0_10, %c0_11, %c0_12] : memref<1x8x128xf32, #tpu.memory_space<vmem>>, vector<1x8x128xf32>
    %27 = vector.shape_cast %26 : vector<1x8x128xf32> to vector<8x128xf32>
    %28 = vector.shape_cast %25 : vector<8x128xf32> to vector<1x8x128xf32>
    tpu.vector_store %arg3[%c0_10, %c0_11, %c0_12], %28 {strides = array<i32>} : memref<1x8x128xf32, #tpu.memory_space<vmem>>, vector<1x8x128xf32>,
    return
  }
  func.func @transform_0(%arg0: i32) -> (i32, i32) {
    %c0_i32 = arith.constant 0 : i32
    %c0_i32_0 = arith.constant 0 : i32
    return %arg0, %c0_i32 : i32, i32
  }
  func.func @transform_1(%arg0: i32) -> (i32, i32) {
    %c0_i32 = arith.constant 0 : i32
    %c0_i32_0 = arith.constant 0 : i32
    return %arg0, %c0_i32 : i32, i32
  }
  func.func @transform_2(%arg0: i32) -> (i32, i32, i32) {
    %c0_i32 = arith.constant 0 : i32
    %c0_i32_0 = arith.constant 0 : i32
    %c0_i32_1 = arith.constant 0 : i32
    return %arg0, %c0_i32, %c0_i32_0 : i32, i32, i32
  }
}

</mosaic_0001>

<llo_original>
// kernel: tpu_custom_call.1
$region0: #{tpu_custom_call.1}
  #allocation0 [shape = 'u32[]', space=smem, size = 0x4, offset = 0x4, fixed_abs, tag = 'smem constant byte address 0x4 - core index']
  #allocation1 [shape = 'u32[144,128]{1,0:T(1,128)}', space=vmem, size = 0x12000, scoped, tag = 'internal scratch']
  %s0 = inlined_call_operand.hbm [shape: f32[16,128], index: 0, kind: input, shape index: {}]
  %s1 = inlined_call_operand.hbm [shape: f32[16,128], index: 1, kind: input, shape index: {}]
  %s2 = inlined_call_operand.hbm [shape: f32[2,8,128], index: 2, kind: output, shape index: {}]
  %s3 = sld [smem:[#allocation0]]
  $region49: #{tpu_custom_call.1} parent=0
    _
  %s5 = ssub.s32 1, %s3
  %s6 = scalar_select 0, %s5, %s3
  $region1: #{tpu_custom_call.1} parent=0
    #allocation2 [shape = 'u8[8192]{0}', space=vmem, size = 0x2000, scoped, tag = 'input window, operand 0']
    #allocation3 [shape = 's32[2]{0}', space=sflag, size = 0x8, scoped, tag = 'scoped memory for tpu_custom_call.1']
    #allocation4 [shape = 's32[2]{0}', space=sflag, size = 0x8, scoped, tag = 'scoped memory for tpu_custom_call.1']
    #allocation5 [shape = 'u8[8192]{0}', space=vmem, size = 0x2000, scoped, tag = 'input window, operand 1']
    #allocation6 [shape = 's32[2]{0}', space=sflag, size = 0x8, scoped, tag = 'scoped memory for tpu_custom_call.1']
    #allocation7 [shape = 'u8[8192]{0}', space=vmem, size = 0x2000, scoped, tag = 'output window, operand 0']
    %7 = vsyncpa [#allocation3], 0
    %s8 = scalar_lea.sflag [#allocation3], 1
    %9 = vsyncpa %s8, 0
    %10 = vsyncpa [#allocation6], 0
    %s11 = scalar_lea.sflag [#allocation6], 1
    %12 = vsyncpa %s11, 0
    %13 = vsyncpa [#allocation4], 0
    %s14 = scalar_lea.sflag [#allocation4], 1
    %15 = vsyncpa %s14, 0
    loop: start=0, step=1, limit=4
    $region2: #{tpu_custom_call.1} parent=1 // loop_pre_header
      _
    $region3: #{tpu_custom_call.1} parent=1 // loop_header
      %s17 = sphi 0, %s21
      %p18 = scmp.ge.s32.totalorder %s17, 4
      %s27 = sphi 0, %s29
      %s30 = sphi 0, %s27
      %s31 = sphi 0, %s30
      %s47 = sphi 0, %s31
      %s53 = sphi 0, %s55
      %s56 = sphi 0, %s53
      %s57 = sphi 0, %s56
      %s73 = sphi 0, %s57
      %s79 = sphi 0, %s81
      %s82 = sphi 0, %s79
      %s83 = sphi 0, %s82
      %s99 = sphi 0, %s83
    $region4: #{tpu_custom_call.1} parent=1 // loop_header_branch
      %20 = sbr.rel (%p18) target = $region8
    $region5: #{tpu_custom_call.1} parent=1 // loop_body
      %s22 = ssub.s32 %s17, 1
      %s23 = ssub.s32 %s17, 2
      %s24 = sadd.s32 %s17, 1
      %s25 = ssub.s32 %s17, %s24
      %p26 = scmp.eq.s32.totalorder %s25, 0
      %s28 = sadd.s32 %s27, 1
      %s29 = scalar_select %p26, %s27, %s28
      %p32 = pneg %p26
      %p33 = scmp.eq.s32.totalorder %s17, 1
      %p34 = por %p32, %p33
      %p35 = scmp.ne.s32.totalorder %s27, %s30
      %p36 = scmp.eq.s32.totalorder %s17, 0
      %p37 = por %p35, %p36
      %p38 = scmp.ne.s32.totalorder %s27, %s30
      %p39 = scmp.eq.s32.totalorder %s22, 1
      %p40 = por %p38, %p39
      %p41 = scmp.ne.s32.totalorder %s30, %s31
      %p42 = scmp.eq.s32.totalorder %s22, 0
      %p43 = por %p41, %p42
      %p44 = scmp.ne.s32.totalorder %s30, %s31
      %p45 = scmp.eq.s32.totalorder %s23, 1
      %p46 = por %p44, %p45
      %p48 = scmp.ne.s32.totalorder %s31, %s47
      %p49 = scmp.eq.s32.totalorder %s23, 0
      %p50 = por %p48, %p49
      %s51 = ssub.s32 %s17, %s24
      %p52 = scmp.eq.s32.totalorder %s51, 0
      %s54 = sadd.s32 %s53, 1
      %s55 = scalar_select %p52, %s53, %s54
      %p58 = pneg %p52
      %p59 = scmp.eq.s32.totalorder %s17, 1
      %p60 = por %p58, %p59
      %p61 = scmp.ne.s32.totalorder %s53, %s56
      %p62 = scmp.eq.s32.totalorder %s17, 0
      %p63 = por %p61, %p62
      %p64 = scmp.ne.s32.totalorder %s53, %s56
      %p65 = scmp.eq.s32.totalorder %s22, 1
      %p66 = por %p64, %p65
      %p67 = scmp.ne.s32.totalorder %s56, %s57
      %p68 = scmp.eq.s32.totalorder %s22, 0
      %p69 = por %p67, %p68
      %p70 = scmp.ne.s32.totalorder %s56, %s57
      %p71 = scmp.eq.s32.totalorder %s23, 1
      %p72 = por %p70, %p71
      %p74 = scmp.ne.s32.totalorder %s57, %s73
      %p75 = scmp.eq.s32.totalorder %s23, 0
      %p76 = por %p74, %p75
      %s77 = ssub.s32 %s17, %s24
      %p78 = scmp.eq.s32.totalorder %s77, 0
      %s80 = sadd.s32 %s79, 1
      %s81 = scalar_select %p78, %s79, %s80
      %p84 = pneg %p78
      %p85 = scmp.eq.s32.totalorder %s17, 1
      %p86 = por %p84, %p85
      %p87 = scmp.ne.s32.totalorder %s79, %s82
      %p88 = scmp.eq.s32.totalorder %s17, 0
      %p89 = por %p87, %p88
      %p90 = scmp.ne.s32.totalorder %s79, %s82
      %p91 = scmp.eq.s32.totalorder %s22, 1
      %p92 = por %p90, %p91
      %p93 = scmp.ne.s32.totalorder %s82, %s83
      %p94 = scmp.eq.s32.totalorder %s22, 0
      %p95 = por %p93, %p94
      %p96 = scmp.ne.s32.totalorder %s82, %s83
      %p97 = scmp.eq.s32.totalorder %s23, 1
      %p98 = por %p96, %p97
      %p100 = scmp.ne.s32.totalorder %s83, %s99
      %p101 = scmp.eq.s32.totalorder %s23, 0
      %p102 = por %p100, %p101
      %p103 = scmp.le.s32.totalorder 1, %s17
      %p104 = scmp.lt.s32.totalorder %s17, 3
      %p105 = pnand %p103, %p104
      %p106 = pneg %p105
      // Predicated region
      $region9: #{tpu_custom_call.1} parent=5 // pred_check
        _
      $region10: #{tpu_custom_call.1} parent=5 // pred_check_branch
        %108 = sbr.rel (%p105) target = $region12
      $region11: #{tpu_custom_call.1} parent=5 // pred_region
        %s109 = ssub.s32 %s17, 1
      $region12: #{tpu_custom_call.1} parent=5 // pred_fallthru
        _
      %p110 = scmp.lt.s32.totalorder %s17, 2
      // Predicated region
      $region13: #{tpu_custom_call.1} parent=5 // pred_check
        %p111 = pneg %p110
      $region14: #{tpu_custom_call.1} parent=5 // pred_check_branch
        %113 = sbr.rel (%p111) target = $region16
      $region15: #{tpu_custom_call.1} parent=5 // pred_region
        // Predicated region
        $region17: #{tpu_custom_call.1} parent=15 // pred_check
          %p114 = pneg %p37
        $region18: #{tpu_custom_call.1} parent=15 // pred_check_branch
          %116 = sbr.rel (%p114) target = $region20
        $region19: #{tpu_custom_call.1} parent=15 // pred_region
          %s117 = sand.u32 %s27, 1
          %s118 = scalar_lea.sflag [#allocation3], %s117
          %s119 = sand.u32 %s27, 1
          %s120 = smul.addr %s119, 8
          %s121 = scalar_lea.vmem [#allocation2], %s120
          %s123 = ssub.s32 128, 128
          %124 = vsyncadd %s118, %s123
          %s125 = smul.addr %s17, 128
          %s126 = scalar_lea.hbm %s0, %s125
          %s128 = sshll.u32 %s121, 4
          %s129 = int_to_ptr.vmem [resolvable:$true] %s128
          %131 = dma.hbm_to_vmem [thread:$0]  %s126, 128, %s129, %s118
        $region20: #{tpu_custom_call.1} parent=15 // pred_fallthru
          _
        // Predicated region
        $region21: #{tpu_custom_call.1} parent=15 // pred_check
          %p132 = pneg %p63
        $region22: #{tpu_custom_call.1} parent=15 // pred_check_branch
          %134 = sbr.rel (%p132) target = $region24
        $region23: #{tpu_custom_call.1} parent=15 // pred_region
          %s135 = sand.u32 %s53, 1
          %s136 = scalar_lea.sflag [#allocation6], %s135
          %s137 = sand.u32 %s53, 1
          %s138 = smul.addr %s137, 8
          %s139 = scalar_lea.vmem [#allocation5], %s138
          %s141 = ssub.s32 128, 128
          %142 = vsyncadd %s136, %s141
          %s143 = smul.addr %s17, 128
          %s144 = scalar_lea.hbm %s1, %s143
          %s146 = sshll.u32 %s139, 4
          %s147 = int_to_ptr.vmem [resolvable:$true] %s146
          %149 = dma.hbm_to_vmem [thread:$0]  %s144, 128, %s147, %s136
        $region24: #{tpu_custom_call.1} parent=15 // pred_fallthru
          _
      $region16: #{tpu_custom_call.1} parent=5 // pred_fallthru
        _
      %p150 = scmp.le.s32.totalorder 1, %s17
      %p151 = scmp.lt.s32.totalorder %s17, 3
      %p152 = pnand %p150, %p151
      %p153 = pneg %p152
      // Predicated region
      $region25: #{tpu_custom_call.1} parent=5 // pred_check
        _
      $region26: #{tpu_custom_call.1} parent=5 // pred_check_branch
        %155 = sbr.rel (%p152) target = $region28
      $region27: #{tpu_custom_call.1} parent=5 // pred_region
        %s156 = ssub.s32 %s17, 1
        %s157 = sand.u32 %s30, 1
        %s158 = scalar_lea.sflag [#allocation3], %s157
        %s159 = sand.u32 %s30, 1
        %s160 = smul.addr %s159, 8
        %s161 = scalar_lea.vmem [#allocation2], %s160
        // Predicated region
        $region29: #{tpu_custom_call.1} parent=27 // pred_check
          %p162 = pneg %p43
        $region30: #{tpu_custom_call.1} parent=27 // pred_check_branch
          %164 = sbr.rel (%p162) target = $region32
        $region31: #{tpu_custom_call.1} parent=27 // pred_region
          %165 = dma.done %s158, 128
        $region32: #{tpu_custom_call.1} parent=27 // pred_fallthru
          _
        %s166 = sand.u32 %s56, 1
        %s167 = scalar_lea.sflag [#allocation6], %s166
        %s168 = sand.u32 %s56, 1
        %s169 = smul.addr %s168, 8
        %s170 = scalar_lea.vmem [#allocation5], %s169
        // Predicated region
        $region33: #{tpu_custom_call.1} parent=27 // pred_check
          %p171 = pneg %p69
        $region34: #{tpu_custom_call.1} parent=27 // pred_check_branch
          %173 = sbr.rel (%p171) target = $region36
        $region35: #{tpu_custom_call.1} parent=27 // pred_region
          %174 = dma.done %s167, 128
        $region36: #{tpu_custom_call.1} parent=27 // pred_fallthru
          _
        %s175 = sand.u32 %s30, 1
        %s176 = scalar_lea.sflag [#allocation3], %s175
        %s177 = sand.u32 %s30, 1
        %s178 = smul.addr %s177, 8
        %s179 = scalar_lea.vmem [#allocation2], %s178
        %p180 = pneg %p43
        %p181 = pneg %p40
        %s182 = sand.u32 %s56, 1
        %s183 = scalar_lea.sflag [#allocation6], %s182
        %s184 = sand.u32 %s56, 1
        %s185 = smul.addr %s184, 8
        %s186 = scalar_lea.vmem [#allocation5], %s185
        %p187 = pneg %p69
        %p188 = pneg %p66
        %p189 = pneg %p95
        %p190 = pneg %p92
        %s191 = sand.u32 %s82, 1
        %s192 = scalar_lea.sflag [#allocation4], %s191
        %s193 = sand.u32 %s82, 1
        %s194 = smul.addr %s193, 8
        %s195 = scalar_lea.vmem [#allocation7], %s194
        %v196 = vld [vmem:[%s161] sm:$0xff]
        %v197 = vld [vmem:[%s170] sm:$0xff]
        %v198 = vand.u32 2147483647, %v196
        %v199 = vsub.f32 0.0, %v198
        %v200 = vmul.f32 %v199, 1.442695
        %v201 = vpow.pop %v200
        %v202 = vadd.f32 %v201, 1.0
        %v203 = vlog2.pop %v202
        %v204 = vmul.f32 %v203, 0.6931472
        %v205 = vmax.f32 %v196, 0.0
        %v206 = vadd.f32 %v205, %v204
        %v207 = vsub.f32 %v206, %v196
        %v208 = vmin.f32 %v207, 100.0
        %v209 = vmul.f32 %v197, %v208
        %v210 = vsub.f32 1.0, %v197
        %v211 = vmin.f32 %v206, 100.0
        %v212 = vmul.f32 %v210, %v211
        %v213 = vadd.f32 %v209, %v212
        %v214 = vadd.f32 %v213, 0.0
        %v215 = vadd.f32 %v214, 0.0
        %216 = vst [vmem:[%s195] sm:$0xff] %v215
        %s217 = sand.u32 %s82, 1
        %s218 = scalar_lea.sflag [#allocation4], %s217
        %s219 = sand.u32 %s82, 1
        %s220 = smul.addr %s219, 8
        %s221 = scalar_lea.vmem [#allocation7], %s220
        // Predicated region
        $region37: #{tpu_custom_call.1} parent=27 // pred_check
          %p222 = pneg %p92
        $region38: #{tpu_custom_call.1} parent=27 // pred_check_branch
          %224 = sbr.rel (%p222) target = $region40
        $region39: #{tpu_custom_call.1} parent=27 // pred_region
          %s226 = ssub.s32 128, 128
          %227 = vsyncadd %s218, %s226
          %s228 = smul.addr %s22, 128
          %s229 = scalar_lea.hbm %s2, %s228
          %s231 = sshll.u32 %s221, 4
          %s232 = int_to_ptr.vmem [resolvable:$true] %s231
          %234 = dma.vmem_to_hbm [thread:$0]  %s232, 128, %s229, %s218
        $region40: #{tpu_custom_call.1} parent=27 // pred_fallthru
          _
      $region28: #{tpu_custom_call.1} parent=5 // pred_fallthru
        _
      %p235 = scmp.le.s32.totalorder 2, %s17
      // Predicated region
      $region41: #{tpu_custom_call.1} parent=5 // pred_check
        %p236 = pneg %p235
      $region42: #{tpu_custom_call.1} parent=5 // pred_check_branch
        %238 = sbr.rel (%p236) target = $region44
      $region43: #{tpu_custom_call.1} parent=5 // pred_region
        %s239 = ssub.s32 %s17, 2
        // Predicated region
        $region45: #{tpu_custom_call.1} parent=43 // pred_check
          %p240 = pneg %p98
        $region46: #{tpu_custom_call.1} parent=43 // pred_check_branch
          %242 = sbr.rel (%p240) target = $region48
        $region47: #{tpu_custom_call.1} parent=43 // pred_region
          %s243 = sand.u32 %s83, 1
          %s244 = scalar_lea.sflag [#allocation4], %s243
          %s245 = sand.u32 %s83, 1
          %s246 = smul.addr %s245, 8
          %s247 = scalar_lea.vmem [#allocation7], %s246
          %248 = dma.done %s244, 128
        $region48: #{tpu_custom_call.1} parent=43 // pred_fallthru
          _
      $region44: #{tpu_custom_call.1} parent=5 // pred_fallthru
        _
    $region6: #{tpu_custom_call.1} parent=1 // loop_footer
      %s21 = sadd.s32 1, %s17
    $region7: #{tpu_custom_call.1} parent=1 // loop_footer_branch
      %16 = sbr.rel target = $region3
    $region8: #{tpu_custom_call.1} parent=1 // loop_exit
      _
    %249 = vsyncpa [#allocation3], 1
    %s250 = scalar_lea.sflag [#allocation3], 1
    %251 = vsyncpa %s250, 1
    %252 = vsyncpa [#allocation6], 1
    %s253 = scalar_lea.sflag [#allocation6], 1
    %254 = vsyncpa %s253, 1
    %255 = vsyncpa [#allocation4], 1
    %s256 = scalar_lea.sflag [#allocation4], 1
    %257 = vsyncpa %s256, 1

</llo_original>
